<compile_context>
chip_gen: v6e
topology: v6e:2x2x1
jax: 0.10.0
libtpu: 0.0.40
codegen_flags: <defaults>
</compile_context>

<pallas_src>
import functools

import jax
import jax.numpy as jnp
from jax.experimental import pallas as pl
from jax.experimental.pallas import tpu as pltpu


def _round_up(x, m):
    return -(-x // m) * m


def _mlp_kernel(s_ref, a_ref, w1s_ref, w1a_ref, b1_ref, w2_ref, b2_ref,
                w3_ref, b3_ref, o_ref):
    """Fused forward: relu(xs@W1s + xa@W1a + b1) -> relu(.@W2+b2) -> .@W3+b3."""
    xs = s_ref[...].astype(jnp.float32)
    xa = a_ref[...].astype(jnp.float32)
    h1 = (jnp.dot(xs, w1s_ref[...], preferred_element_type=jnp.float32)
          + jnp.dot(xa, w1a_ref[...], preferred_element_type=jnp.float32)
          + b1_ref[...])
    h1 = jnp.maximum(h1, 0.0)
    h2 = jnp.dot(h1, w2_ref[...], preferred_element_type=jnp.float32) + b2_ref[...]
    h2 = jnp.maximum(h2, 0.0)
    out = jnp.dot(h2, w3_ref[...], preferred_element_type=jnp.float32) + b3_ref[...]
    o_ref[...] = out.astype(o_ref.dtype)


@functools.partial(jax.jit, static_argnames=("block_rows", "n_total"))
def _forward_impl(s2, a2, padded_params, *, block_rows, n_total):
    """s2: (n_rows, state_dim), a2: (n_rows, action_dim) -> (n_rows, state_dim)."""
    w1s, w1a, b1, w2, b2, w3, b3 = padded_params
    n_rows = s2.shape[0]
    state_dim = s2.shape[-1]
    action_dim = a2.shape[-1]
    hid_pad = w1s.shape[1]
    out_pad = w3.shape[1]

    pad = n_total - n_rows
    if pad:
        s2 = jnp.pad(s2, ((0, pad), (0, 0)))
        a2 = jnp.pad(a2, ((0, pad), (0, 0)))

    grid = (n_total // block_rows,)
    full = lambda shape: pl.BlockSpec(shape, lambda i: (0, 0))

    out = pl.pallas_call(
        _mlp_kernel,
        out_shape=jax.ShapeDtypeStruct((n_total, out_pad), s2.dtype),
        grid_spec=pltpu.PrefetchScalarGridSpec(
            num_scalar_prefetch=0,
            grid=grid,
            in_specs=[
                pl.BlockSpec((block_rows, state_dim), lambda i: (i, 0)),
                pl.BlockSpec((block_rows, action_dim), lambda i: (i, 0)),
                full((state_dim, hid_pad)),
                full((action_dim, hid_pad)),
                full((1, hid_pad)),
                full((hid_pad, hid_pad)),
                full((1, hid_pad)),
                full((hid_pad, out_pad)),
                full((1, out_pad)),
            ],
            out_specs=pl.BlockSpec((block_rows, out_pad), lambda i: (i, 0)),
        ),
        compiler_params=pltpu.CompilerParams(
            dimension_semantics=("parallel",),
        ),
    )(s2, a2, w1s, w1a, b1, w2, b2, w3, b3)

    # Slice off padded rows and the padded (zero) output lanes.
    return out[:n_rows, :state_dim]


def absolute_dynamics_forward(state, action, padded_params, *, max_block_rows=512):
    """state: (..., state_dim), action: (..., action_dim) -> (..., state_dim)."""
    state_dim = state.shape[-1]
    lead_shape = state.shape[:-1]
    s2 = state.reshape(-1, state_dim)
    a2 = action.reshape(-1, action.shape[-1])
    n_rows = s2.shape[0]

    # Whole-batch block (grid=(1,)) for small batches; cap per-step rows for
    # big batches so the batch axis still splits across cores / pipelines.
    padded8 = _round_up(max(n_rows, 8), 8)
    block_rows = padded8 if padded8 <= max_block_rows else max_block_rows
    n_total = _round_up(n_rows, block_rows)

    out2 = _forward_impl(s2, a2, padded_params,
                         block_rows=block_rows, n_total=n_total)
    return out2.reshape(lead_shape + (state_dim,))


def init_params(key, state_dim, action_dim, hidden=100, dtype=jnp.float32):
    """Deterministic parameter init (same shapes/init as the PyTorch module).

    Weights stored as (in_features, out_features) = transpose of nn.Linear.weight.
    """
    ks = jax.random.split(key, 6)
    in_dim = state_dim + action_dim

    def lin(kw, kb, fan_in, fan_out):
        bound = 1.0 / jnp.sqrt(float(fan_in))
        w = jax.random.uniform(kw, (fan_in, fan_out), dtype, -bound, bound)
        b = jax.random.uniform(kb, (fan_out,), dtype, -bound, bound)
        return w, b

    w1, b1 = lin(ks[0], ks[1], in_dim, hidden)
    w2, b2 = lin(ks[2], ks[3], hidden, hidden)
    w3, b3 = lin(ks[4], ks[5], hidden, state_dim)
    return (w1, b1, w2, b2, w3, b3)


def prepare_params(params, state_dim):
    """One-time prep: split W1 into state/action parts and zero-pad the hidden
    and output feature dims up to a multiple of 128 (lane-dense tiles)."""
    w1, b1, w2, b2, w3, b3 = params
    hid = w1.shape[1]
    out_dim = w3.shape[1]
    hid_pad = _round_up(hid, 128)
    out_pad = _round_up(out_dim, 128)
    dh = hid_pad - hid
    do = out_pad - out_dim

    w1s = jnp.pad(w1[:state_dim], ((0, 0), (0, dh)))
    w1a = jnp.pad(w1[state_dim:], ((0, 0), (0, dh)))
    b1p = jnp.pad(b1, (0, dh)).reshape(1, -1)
    w2p = jnp.pad(w2, ((0, dh), (0, dh)))
    b2p = jnp.pad(b2, (0, dh)).reshape(1, -1)
    w3p = jnp.pad(w3, ((0, dh), (0, do)))
    b3p = jnp.pad(b3, (0, do)).reshape(1, -1)
    # Zero pad rows/cols guarantee padded lanes carry exact zeros through
    # relu/bias, so the :state_dim slice of the output is bit-exact.
    return (w1s, w1a, b1p, w2p, b2p, w3p, b3p)


def _reference_forward(state, action, params):
    """Plain-JAX reference matching the PyTorch forward semantics."""
    w1, b1, w2, b2, w3, b3 = params
    x = jnp.concatenate((state, action), axis=-1)
    h = jax.nn.relu(x @ w1 + b1)
    h = jax.nn.relu(h @ w2 + b2)
    return h @ w3 + b3


if __name__ == "__main__":
    state_dim, action_dim = 3, 3
    batch = 10  # deliberately not a multiple of 8 to exercise row padding

    key = jax.random.PRNGKey(0)
    k_state, k_action, k_params = jax.random.split(key, 3)

    state = jax.random.normal(k_state, (batch, state_dim), jnp.float32)
    action = jax.random.normal(k_action, (batch, action_dim), jnp.float32)
    params = init_params(k_params, state_dim, action_dim)
    padded_params = prepare_params(params, state_dim)

    next_state = absolute_dynamics_forward(state, action, padded_params)
    next_state = jax.block_until_ready(next_state)

    ref = _reference_forward(state, action, params)
    assert next_state.shape == (batch, state_dim)
    assert jnp.allclose(next_state, ref, atol=1e-5, rtol=1e-5)

    # Also exercise arbitrary leading dims (..., state_dim).
    state_nd = state.reshape(2, 5, state_dim)
    action_nd = action.reshape(2, 5, action_dim)
    out_nd = jax.block_until_ready(
        absolute_dynamics_forward(state_nd, action_nd, padded_params))
    assert out_nd.shape == (2, 5, state_dim)
    assert jnp.allclose(out_nd.reshape(batch, state_dim), ref, atol=1e-5, rtol=1e-5)

    print("KERNEL_OK")
</pallas_src>

<mosaic_0001>
module attributes {stable_mosaic.version = 11 : i64} {
  func.func @_mlp_kernel(%arg0: i32, %arg1: memref<16x3xf32, #tpu.memory_space<vmem>>, %arg2: memref<16x3xf32, #tpu.memory_space<vmem>>, %arg3: memref<3x128xf32, #tpu.memory_space<vmem>>, %arg4: memref<3x128xf32, #tpu.memory_space<vmem>>, %arg5: memref<1x128xf32, #tpu.memory_space<vmem>>, %arg6: memref<128x128xf32, #tpu.memory_space<vmem>>, %arg7: memref<1x128xf32, #tpu.memory_space<vmem>>, %arg8: memref<128x128xf32, #tpu.memory_space<vmem>>, %arg9: memref<1x128xf32, #tpu.memory_space<vmem>>, %arg10: memref<16x128xf32, #tpu.memory_space<vmem>>) attributes {dimension_semantics = [#tpu.dimension_semantics<parallel>], iteration_bounds = array<i64: 1>, scalar_prefetch = 0 : i64, scratch_operands = 0 : i64, tpu.core_type = #tpu.core_type<tc>, window_params = [{transform_indices = @transform_0, window_bounds = array<i64: 16, 3>}, {transform_indices = @transform_1, window_bounds = array<i64: 16, 3>}, {pipeline_mode = #tpu.pipeline_mode<synchronous>, transform_indices = @transform_2, window_bounds = array<i64: 3, 128>}, {pipeline_mode = #tpu.pipeline_mode<synchronous>, transform_indices = @transform_3, window_bounds = array<i64: 3, 128>}, {pipeline_mode = #tpu.pipeline_mode<synchronous>, transform_indices = @transform_4, window_bounds = array<i64: 1, 128>}, {pipeline_mode = #tpu.pipeline_mode<synchronous>, transform_indices = @transform_5, window_bounds = array<i64: 128, 128>}, {pipeline_mode = #tpu.pipeline_mode<synchronous>, transform_indices = @transform_6, window_bounds = array<i64: 1, 128>}, {pipeline_mode = #tpu.pipeline_mode<synchronous>, transform_indices = @transform_7, window_bounds = array<i64: 128, 128>}, {pipeline_mode = #tpu.pipeline_mode<synchronous>, transform_indices = @transform_8, window_bounds = array<i64: 1, 128>}, {transform_indices = @transform_9, window_bounds = array<i64: 16, 128>}]} {
    %c0 = arith.constant 0 : index
    %c0_0 = arith.constant 0 : index
    %0 = vector.load %arg1[%c0, %c0_0] : memref<16x3xf32, #tpu.memory_space<vmem>>, vector<16x3xf32>
    %c0_1 = arith.constant 0 : index
    %c0_2 = arith.constant 0 : index
    %1 = vector.load %arg2[%c0_1, %c0_2] : memref<16x3xf32, #tpu.memory_space<vmem>>, vector<16x3xf32>
    %c0_3 = arith.constant 0 : index
    %c0_4 = arith.constant 0 : index
    %2 = vector.load %arg3[%c0_3, %c0_4] : memref<3x128xf32, #tpu.memory_space<vmem>>, vector<3x128xf32>
    %cst = arith.constant dense<0.000000e+00> : vector<16x128xf32>
    %3 = tpu.matmul %0, %2, %cst {dimension_numbers = #tpu.dot_dimension_numbers<[1], [0], [0], [1], [0, 0, 1, 1], [], []>} : vector<16x3xf32>, vector<3x128xf32>, vector<16x128xf32> -> vector<16x128xf32>
    %c0_5 = arith.constant 0 : index
    %c0_6 = arith.constant 0 : index
    %4 = vector.load %arg4[%c0_5, %c0_6] : memref<3x128xf32, #tpu.memory_space<vmem>>, vector<3x128xf32>
    %cst_7 = arith.constant dense<0.000000e+00> : vector<16x128xf32>
    %5 = tpu.matmul %1, %4, %cst_7 {dimension_numbers = #tpu.dot_dimension_numbers<[1], [0], [0], [1], [0, 0, 1, 1], [], []>} : vector<16x3xf32>, vector<3x128xf32>, vector<16x128xf32> -> vector<16x128xf32>
    %6 = arith.addf %3, %5 : vector<16x128xf32>
    %c0_8 = arith.constant 0 : index
    %c0_9 = arith.constant 0 : index
    %7 = vector.load %arg5[%c0_8, %c0_9] : memref<1x128xf32, #tpu.memory_space<vmem>>, vector<1x128xf32>
    %8 = vector.broadcast %7 : vector<1x128xf32> to vector<16x128xf32>
    %9 = arith.addf %6, %8 : vector<16x128xf32>
    %cst_10 = arith.constant 0.000000e+00 : f32
    %10 = vector.broadcast %cst_10 : f32 to vector<16x128xf32>
    %11 = arith.maximumf %9, %10 : vector<16x128xf32>
    %c0_11 = arith.constant 0 : index
    %c0_12 = arith.constant 0 : index
    %12 = vector.load %arg6[%c0_11, %c0_12] : memref<128x128xf32, #tpu.memory_space<vmem>>, vector<128x128xf32>
    %cst_13 = arith.constant dense<0.000000e+00> : vector<16x128xf32>
    %13 = tpu.matmul %11, %12, %cst_13 {dimension_numbers = #tpu.dot_dimension_numbers<[1], [0], [0], [1], [0, 0, 1, 1], [], []>} : vector<16x128xf32>, vector<128x128xf32>, vector<16x128xf32> -> vector<16x128xf32>
    %c0_14 = arith.constant 0 : index
    %c0_15 = arith.constant 0 : index
    %14 = vector.load %arg7[%c0_14, %c0_15] : memref<1x128xf32, #tpu.memory_space<vmem>>, vector<1x128xf32>
    %15 = vector.broadcast %14 : vector<1x128xf32> to vector<16x128xf32>
    %16 = arith.addf %13, %15 : vector<16x128xf32>
    %cst_16 = arith.constant 0.000000e+00 : f32
    %17 = vector.broadcast %cst_16 : f32 to vector<16x128xf32>
    %18 = arith.maximumf %16, %17 : vector<16x128xf32>
    %c0_17 = arith.constant 0 : index
    %c0_18 = arith.constant 0 : index
    %19 = vector.load %arg8[%c0_17, %c0_18] : memref<128x128xf32, #tpu.memory_space<vmem>>, vector<128x128xf32>
    %cst_19 = arith.constant dense<0.000000e+00> : vector<16x128xf32>
    %20 = tpu.matmul %18, %19, %cst_19 {dimension_numbers = #tpu.dot_dimension_numbers<[1], [0], [0], [1], [0, 0, 1, 1], [], []>} : vector<16x128xf32>, vector<128x128xf32>, vector<16x128xf32> -> vector<16x128xf32>
    %c0_20 = arith.constant 0 : index
    %c0_21 = arith.constant 0 : index
    %21 = vector.load %arg9[%c0_20, %c0_21] : memref<1x128xf32, #tpu.memory_space<vmem>>, vector<1x128xf32>
    %22 = vector.broadcast %21 : vector<1x128xf32> to vector<16x128xf32>
    %23 = arith.addf %20, %22 : vector<16x128xf32>
    %c0_22 = arith.constant 0 : index
    %c0_23 = arith.constant 0 : index
    %24 = vector.load %arg10[%c0_22, %c0_23] : memref<16x128xf32, #tpu.memory_space<vmem>>, vector<16x128xf32>
    tpu.vector_store %arg10[%c0_22, %c0_23], %23 {strides = array<i32>} : memref<16x128xf32, #tpu.memory_space<vmem>>, vector<16x128xf32>,
    return
  }
  func.func @transform_0(%arg0: i32) -> (i32, i32) {
    %c0_i32 = arith.constant 0 : i32
    %c0_i32_0 = arith.constant 0 : i32
    return %arg0, %c0_i32 : i32, i32
  }
  func.func @transform_1(%arg0: i32) -> (i32, i32) {
    %c0_i32 = arith.constant 0 : i32
    %c0_i32_0 = arith.constant 0 : i32
    return %arg0, %c0_i32 : i32, i32
  }
  func.func @transform_2(%arg0: i32) -> (i32, i32) {
    %c0_i32 = arith.constant 0 : i32
    %c0_i32_0 = arith.constant 0 : i32
    %c0_i32_1 = arith.constant 0 : i32
    return %c0_i32, %c0_i32_0 : i32, i32
  }
  func.func @transform_3(%arg0: i32) -> (i32, i32) {
    %c0_i32 = arith.constant 0 : i32
    %c0_i32_0 = arith.constant 0 : i32
    %c0_i32_1 = arith.constant 0 : i32
    return %c0_i32, %c0_i32_0 : i32, i32
  }
  func.func @transform_4(%arg0: i32) -> (i32, i32) {
    %c0_i32 = arith.constant 0 : i32
    %c0_i32_0 = arith.constant 0 : i32
    %c0_i32_1 = arith.constant 0 : i32
    return %c0_i32, %c0_i32_0 : i32, i32
  }
  func.func @transform_5(%arg0: i32) -> (i32, i32) {
    %c0_i32 = arith.constant 0 : i32
    %c0_i32_0 = arith.constant 0 : i32
    %c0_i32_1 = arith.constant 0 : i32
    return %c0_i32, %c0_i32_0 : i32, i32
  }
  func.func @transform_6(%arg0: i32) -> (i32, i32) {
    %c0_i32 = arith.constant 0 : i32
    %c0_i32_0 = arith.constant 0 : i32
    %c0_i32_1 = arith.constant 0 : i32
    return %c0_i32, %c0_i32_0 : i32, i32
  }
  func.func @transform_7(%arg0: i32) -> (i32, i32) {
    %c0_i32 = arith.constant 0 : i32
    %c0_i32_0 = arith.constant 0 : i32
    %c0_i32_1 = arith.constant 0 : i32
    return %c0_i32, %c0_i32_0 : i32, i32
  }
  func.func @transform_8(%arg0: i32) -> (i32, i32) {
    %c0_i32 = arith.constant 0 : i32
    %c0_i32_0 = arith.constant 0 : i32
    %c0_i32_1 = arith.constant 0 : i32
    return %c0_i32, %c0_i32_0 : i32, i32
  }
  func.func @transform_9(%arg0: i32) -> (i32, i32) {
    %c0_i32 = arith.constant 0 : i32
    %c0_i32_0 = arith.constant 0 : i32
    return %arg0, %c0_i32 : i32, i32
  }
}

</mosaic_0001>

<llo_original>
// kernel: _forward_impl.1
$region0: #{_forward_impl.1}
  #allocation0 [shape = 'u32[]', space=smem, size = 0x4, offset = 0x4, fixed_abs, tag = 'smem constant byte address 0x4 - core index']
  #allocation1 [shape = 'u32[144,128]{1,0:T(1,128)}', space=vmem, size = 0x12000, scoped, tag = 'internal scratch']
  %s0 = inlined_call_operand.vmem [shape: f32[16,3], index: 0, kind: input, shape index: {}]
  %s1 = inlined_call_operand.vmem [shape: f32[16,3], index: 1, kind: input, shape index: {}]
  %s2 = inlined_call_operand.vmem [shape: f32[3,128], index: 2, kind: input, shape index: {}]
  %s3 = inlined_call_operand.vmem [shape: f32[3,128], index: 3, kind: input, shape index: {}]
  %s4 = inlined_call_operand.vmem [shape: f32[1,128], index: 4, kind: input, shape index: {}]
  %s5 = inlined_call_operand.hbm [shape: f32[128,128], index: 5, kind: input, shape index: {}]
  %s6 = inlined_call_operand.vmem [shape: f32[1,128], index: 6, kind: input, shape index: {}]
  %s7 = inlined_call_operand.hbm [shape: f32[128,128], index: 7, kind: input, shape index: {}]
  %s8 = inlined_call_operand.vmem [shape: f32[1,128], index: 8, kind: input, shape index: {}]
  %s9 = inlined_call_operand.vmem [shape: f32[16,128], index: 9, kind: output, shape index: {}]
  %s10 = sld [smem:[#allocation0]]
  $region54: #{_forward_impl.1} parent=0
    _
  %s12 = ssub.s32 1, %s10
  %s13 = scalar_select 0, %s12, %s10
  $region1: #{_forward_impl.1} parent=0
    #allocation2 [shape = 'u8[65536]{0}', space=vmem, size = 0x10000, scoped, tag = 'input window, operand 5, single buffered']
    #allocation3 [shape = 's32[1]{0}', space=sflag, size = 0x4, scoped, tag = 'scoped memory for _forward_impl.1']
    #allocation4 [shape = 'u8[65536]{0}', space=vmem, size = 0x10000, scoped, tag = 'input window, operand 7, single buffered']
    #allocation5 [shape = 's32[1]{0}', space=sflag, size = 0x4, scoped, tag = 'scoped memory for _forward_impl.1']
    %14 = vsyncpa [#allocation3], 0
    %15 = vsyncpa [#allocation5], 0
    // Predicated region
    $region2: #{_forward_impl.1} parent=1 // pred_check
      _
    $region3: #{_forward_impl.1} parent=1 // pred_check_branch
      %17 = sbr.rel (0) target = $region5
    $region4: #{_forward_impl.1} parent=1 // pred_region
      _
    $region5: #{_forward_impl.1} parent=1 // pred_fallthru
      _
    // Predicated region
    $region6: #{_forward_impl.1} parent=1 // pred_check
      _
    $region7: #{_forward_impl.1} parent=1 // pred_check_branch
      %19 = sbr.rel (0) target = $region9
    $region8: #{_forward_impl.1} parent=1 // pred_region
      _
    $region9: #{_forward_impl.1} parent=1 // pred_fallthru
      _
    // Predicated region
    $region10: #{_forward_impl.1} parent=1 // pred_check
      _
    $region11: #{_forward_impl.1} parent=1 // pred_check_branch
      %21 = sbr.rel (0) target = $region13
    $region12: #{_forward_impl.1} parent=1 // pred_region
      _
    $region13: #{_forward_impl.1} parent=1 // pred_fallthru
      _
    // Predicated region
    $region14: #{_forward_impl.1} parent=1 // pred_check
      _
    $region15: #{_forward_impl.1} parent=1 // pred_check_branch
      %23 = sbr.rel (0) target = $region17
    $region16: #{_forward_impl.1} parent=1 // pred_region
      _
    $region17: #{_forward_impl.1} parent=1 // pred_fallthru
      _
    // Predicated region
    $region18: #{_forward_impl.1} parent=1 // pred_check
      _
    $region19: #{_forward_impl.1} parent=1 // pred_check_branch
      %25 = sbr.rel (0) target = $region21
    $region20: #{_forward_impl.1} parent=1 // pred_region
      _
    $region21: #{_forward_impl.1} parent=1 // pred_fallthru
      _
    // Predicated region
    $region22: #{_forward_impl.1} parent=1 // pred_check
      _
    $region23: #{_forward_impl.1} parent=1 // pred_check_branch
      %27 = sbr.rel (0) target = $region25
    $region24: #{_forward_impl.1} parent=1 // pred_region
      %s29 = ssub.s32 2048, 2048
      %30 = vsyncadd [#allocation3], %s29
      %s31 = sshll.u32 [#allocation2], 4
      %s32 = int_to_ptr.vmem [resolvable:$true] %s31
      %37 = dma.hbm_to_vmem [thread:$0]  %s5, 2048, %s32, [#allocation3], 128, 128, 8
    $region25: #{_forward_impl.1} parent=1 // pred_fallthru
      _
    // Predicated region
    $region26: #{_forward_impl.1} parent=1 // pred_check
      _
    $region27: #{_forward_impl.1} parent=1 // pred_check_branch
      %39 = sbr.rel (0) target = $region29
    $region28: #{_forward_impl.1} parent=1 // pred_region
      _
    $region29: #{_forward_impl.1} parent=1 // pred_fallthru
      _
    // Predicated region
    $region30: #{_forward_impl.1} parent=1 // pred_check
      _
    $region31: #{_forward_impl.1} parent=1 // pred_check_branch
      %41 = sbr.rel (0) target = $region33
    $region32: #{_forward_impl.1} parent=1 // pred_region
      %s43 = ssub.s32 2048, 2048
      %44 = vsyncadd [#allocation5], %s43
      %s45 = sshll.u32 [#allocation4], 4
      %s46 = int_to_ptr.vmem [resolvable:$true] %s45
      %51 = dma.hbm_to_vmem [thread:$0]  %s7, 2048, %s46, [#allocation5], 128, 128, 8
    $region33: #{_forward_impl.1} parent=1 // pred_fallthru
      _
    // Predicated region
    $region34: #{_forward_impl.1} parent=1 // pred_check
      _
    $region35: #{_forward_impl.1} parent=1 // pred_check_branch
      %53 = sbr.rel (0) target = $region37
    $region36: #{_forward_impl.1} parent=1 // pred_region
      _
    $region37: #{_forward_impl.1} parent=1 // pred_fallthru
      _
    // Predicated region
    $region38: #{_forward_impl.1} parent=1 // pred_check
      _
    $region39: #{_forward_impl.1} parent=1 // pred_check_branch
      %55 = sbr.rel (0) target = $region41
    $region40: #{_forward_impl.1} parent=1 // pred_region
      %56 = dma.done [#allocation3], 2048
    $region41: #{_forward_impl.1} parent=1 // pred_fallthru
      _
    // Predicated region
    $region42: #{_forward_impl.1} parent=1 // pred_check
      _
    $region43: #{_forward_impl.1} parent=1 // pred_check_branch
      %58 = sbr.rel (0) target = $region45
    $region44: #{_forward_impl.1} parent=1 // pred_region
      %59 = dma.done [#allocation5], 2048
    $region45: #{_forward_impl.1} parent=1 // pred_fallthru
      _
    %v60 = vld [vmem:[%s0] sm:$0xff]
    %v61 = vld [vmem:[%s0 + $0x8] sm:$0xff]
    %v62 = vld [vmem:[%s1] sm:$0xff]
    %v63 = vld [vmem:[%s1 + $0x8] sm:$0xff]
    %v64 = vld [vmem:[%s2] sm:$0x7]
    %v65 = vld [vmem:[%s3] sm:$0x7]
    %vm66 = vcmask 23552
    %v68 = vsel %vm66, %v62, 0
    %v71 = vsel %vm66, %v63, 0
    %vm73 = vcmask 1042432
    %v75 = vsel %vm73, %v65, 0
    %77 = vmatprep.subr.mxu0 0.0
    %78 = vmatpush1.msra.mxu0 0.0
    %79 = vmatprep.subr.mxu0 0.0
    %80 = vmatpush1.msra.mxu0 0.0
    %81 = vmatprep.subr.mxu0 0.0
    %82 = vmatpush1.msra.mxu0 0.0
    %83 = vmatprep.subr.mxu0 0.0
    %84 = vmatpush1.msra.mxu0 0.0
    %85 = vmatprep.subr.mxu0 0.0
    %86 = vmatpush1.msra.mxu0 0.0
    %87 = vmatprep.subr.mxu0 0.0
    %88 = vmatpush1.msra.mxu0 0.0
    %89 = vmatprep.subr.mxu0 0.0
    %90 = vmatpush1.msra.mxu0 0.0
    %91 = vmatprep.subr.mxu0 0.0
    %92 = vmatpush1.msra.mxu0 0.0
    %93 = vmatprep.subr.mxu0 0.0
    %94 = vmatpush1.msra.mxu0 0.0
    %95 = vmatprep.subr.mxu0 0.0
    %96 = vmatpush1.msra.mxu0 0.0
    %97 = vmatprep.subr.mxu0 0.0
    %98 = vmatpush1.msra.mxu0 0.0
    %99 = vmatprep.subr.mxu0 0.0
    %100 = vmatpush1.msra.mxu0 0.0
    %101 = vmatprep.subr.mxu0 0.0
    %102 = vmatpush1.msra.mxu0 0.0
    %103 = vmatprep.subr.mxu0 0.0
    %104 = vmatpush1.msra.mxu0 0.0
    %105 = vmatprep.subr.mxu0 0.0
    %106 = vmatpush1.msra.mxu0 0.0
    %107 = vmatprep.subr.mxu0 0.0
    %108 = vmatpush1.msra.mxu0 %v75
    %109 = vmatprep.subr.mxu0 0.0
    %110 = vmatpush2.msra.mxu0 0.0
    %111 = vmatprep.subr.mxu0 0.0
    %112 = vmatpush2.msra.mxu0 0.0
    %113 = vmatprep.subr.mxu0 0.0
    %114 = vmatpush2.msra.mxu0 0.0
    %115 = vmatprep.subr.mxu0 0.0
    %116 = vmatpush2.msra.mxu0 0.0
    %117 = vmatprep.subr.mxu0 0.0
    %118 = vmatpush2.msra.mxu0 0.0
    %119 = vmatprep.subr.mxu0 0.0
    %120 = vmatpush2.msra.mxu0 0.0
    %121 = vmatprep.subr.mxu0 0.0
    %122 = vmatpush2.msra.mxu0 0.0
    %123 = vmatprep.subr.mxu0 0.0
    %124 = vmatpush2.msra.mxu0 0.0
    %125 = vmatprep.subr.mxu0 0.0
    %126 = vmatpush2.msra.mxu0 0.0
    %127 = vmatprep.subr.mxu0 0.0
    %128 = vmatpush2.msra.mxu0 0.0
    %129 = vmatprep.subr.mxu0 0.0
    %130 = vmatpush2.msra.mxu0 0.0
    %131 = vmatprep.subr.mxu0 0.0
    %132 = vmatpush2.msra.mxu0 0.0
    %133 = vmatprep.subr.mxu0 0.0
    %134 = vmatpush2.msra.mxu0 0.0
    %135 = vmatprep.subr.mxu0 0.0
    %136 = vmatpush2.msra.mxu0 0.0
    %137 = vmatprep.subr.mxu0 0.0
    %138 = vmatpush2.msra.mxu0 0.0
    %139 = vmatprep.subr.mxu0 0.0
    %140 = vmatpush2.msra.mxu0 0.0
    %141 = vmatprep.mubr.f32.mxu0 0.0
    %142 = vmatmul.mubr.f32.gmra.mxu0 %v68
    %v143 = vpop.f32.mrf.mxu0
    %v144 = vadd.f32 0.0, %v143
    %v145 = vpop.f32.mrf.mxu0
    %146 = vmatprep.mubr.f32.mxu0 0.0
    %147 = vmatmul.mubr.f32.gmra.mxu0 %v71
    %v148 = vpop.f32.mrf.mxu0
    %v149 = vadd.f32 0.0, %v148
    %v150 = vpop.f32.mrf.mxu0
    %151 = vdwg.mxu0
    %v153 = vsel %vm66, %v60, 0
    %v156 = vsel %vm66, %v61, 0
    %v159 = vsel %vm73, %v64, 0
    %161 = vmatprep.subr.mxu0 0.0
    %162 = vmatpush1.msra.mxu0 0.0
    %163 = vmatprep.subr.mxu0 0.0
    %164 = vmatpush1.msra.mxu0 0.0
    %165 = vmatprep.subr.mxu0 0.0
    %166 = vmatpush1.msra.mxu0 0.0
    %167 = vmatprep.subr.mxu0 0.0
    %168 = vmatpush1.msra.mxu0 0.0
    %169 = vmatprep.subr.mxu0 0.0
    %170 = vmatpush1.msra.mxu0 0.0
    %171 = vmatprep.subr.mxu0 0.0
    %172 = vmatpush1.msra.mxu0 0.0
    %173 = vmatprep.subr.mxu0 0.0
    %174 = vmatpush1.msra.mxu0 0.0
    %175 = vmatprep.subr.mxu0 0.0
    %176 = vmatpush1.msra.mxu0 0.0
    %177 = vmatprep.subr.mxu0 0.0
    %178 = vmatpush1.msra.mxu0 0.0
    %179 = vmatprep.subr.mxu0 0.0
    %180 = vmatpush1.msra.mxu0 0.0
    %181 = vmatprep.subr.mxu0 0.0
    %182 = vmatpush1.msra.mxu0 0.0
    %183 = vmatprep.subr.mxu0 0.0
    %184 = vmatpush1.msra.mxu0 0.0
    %185 = vmatprep.subr.mxu0 0.0
    %186 = vmatpush1.msra.mxu0 0.0
    %187 = vmatprep.subr.mxu0 0.0
    %188 = vmatpush1.msra.mxu0 0.0
    %189 = vmatprep.subr.mxu0 0.0
    %190 = vmatpush1.msra.mxu0 0.0
    %191 = vmatprep.subr.mxu0 0.0
    %192 = vmatpush1.msra.mxu0 %v159
    %193 = vmatprep.subr.mxu0 0.0
    %194 = vmatpush2.msra.mxu0 0.0
    %195 = vmatprep.subr.mxu0 0.0
    %196 = vmatpush2.msra.mxu0 0.0
    %197 = vmatprep.subr.mxu0 0.0
    %198 = vmatpush2.msra.mxu0 0.0
    %199 = vmatprep.subr.mxu0 0.0
    %200 = vmatpush2.msra.mxu0 0.0
    %201 = vmatprep.subr.mxu0 0.0
    %202 = vmatpush2.msra.mxu0 0.0
    %203 = vmatprep.subr.mxu0 0.0
    %204 = vmatpush2.msra.mxu0 0.0
    %205 = vmatprep.subr.mxu0 0.0
    %206 = vmatpush2.msra.mxu0 0.0
    %207 = vmatprep.subr.mxu0 0.0
    %208 = vmatpush2.msra.mxu0 0.0
    %209 = vmatprep.subr.mxu0 0.0
    %210 = vmatpush2.msra.mxu0 0.0
    %211 = vmatprep.subr.mxu0 0.0
    %212 = vmatpush2.msra.mxu0 0.0
    %213 = vmatprep.subr.mxu0 0.0
    %214 = vmatpush2.msra.mxu0 0.0
    %215 = vmatprep.subr.mxu0 0.0
    %216 = vmatpush2.msra.mxu0 0.0
    %217 = vmatprep.subr.mxu0 0.0
    %218 = vmatpush2.msra.mxu0 0.0
    %219 = vmatprep.subr.mxu0 0.0
    %220 = vmatpush2.msra.mxu0 0.0
    %221 = vmatprep.subr.mxu0 0.0
    %222 = vmatpush2.msra.mxu0 0.0
    %223 = vmatprep.subr.mxu0 0.0
    %224 = vmatpush2.msra.mxu0 0.0
    %225 = vmatprep.mubr.f32.mxu0 0.0
    %226 = vmatmul.mubr.f32.gmra.mxu0 %v153
    %v227 = vpop.f32.mrf.mxu0
    %v228 = vadd.f32 %v144, %v227
    %v229 = vpop.f32.mrf.mxu0
    %230 = vmatprep.mubr.f32.mxu0 0.0
    %231 = vmatmul.mubr.f32.gmra.mxu0 %v156
    %v232 = vpop.f32.mrf.mxu0
    %v233 = vadd.f32 %v149, %v232
    %v234 = vpop.f32.mrf.mxu0
    %235 = vdwg.mxu0
    %v236 = vld [vmem:[%s4] sm:$0x1]
    %v238 = vlaneseq
    %v239 = vshrl.u32 %v238, 7
    %v240 = vsub.s32 0, %v239
    %v241 = vrot.slane %v236, %v240
    %v243 = vadd.f32 %v228, %v241
    %v244 = vadd.f32 %v233, %v241
    %v245 = vmax.f32 %v243, 0.0
    %v246 = vmax.f32 %v244, 0.0
    %v247 = vld [vmem:[#allocation2] sm:$0xff]
    %v248 = vld [vmem:[#allocation2 + $0x8] sm:$0xff]
    %v249 = vld [vmem:[#allocation2 + $0x10] sm:$0xff]
    %v250 = vld [vmem:[#allocation2 + $0x18] sm:$0xff]
    %v251 = vld [vmem:[#allocation2 + $0x20] sm:$0xff]
    %v252 = vld [vmem:[#allocation2 + $0x28] sm:$0xff]
    %v253 = vld [vmem:[#allocation2 + $0x30] sm:$0xff]
    %v254 = vld [vmem:[#allocation2 + $0x38] sm:$0xff]
    %v255 = vld [vmem:[#allocation2 + $0x40] sm:$0xff]
    %v256 = vld [vmem:[#allocation2 + $0x48] sm:$0xff]
    %v257 = vld [vmem:[#allocation2 + $0x50] sm:$0xff]
    %v258 = vld [vmem:[#allocation2 + $0x58] sm:$0xff]
    %v259 = vld [vmem:[#allocation2 + $0x60] sm:$0xff]
    %v260 = vld [vmem:[#allocation2 + $0x68] sm:$0xff]
    %v261 = vld [vmem:[#allocation2 + $0x70] sm:$0xff]
    %v262 = vld [vmem:[#allocation2 + $0x78] sm:$0xff]
    %v263 = vld [vmem:[%s6] sm:$0x1]
    %v265 = vlaneseq
    %v266 = vshrl.u32 %v265, 7
    %v267 = vsub.s32 0, %v266
    %v268 = vrot.slane %v263, %v267
    %270 = vmatprep.subr.mxu0 0.0
    %271 = vmatpush1.msra.mxu0 %v262
    %272 = vmatprep.subr.mxu0 0.0
    %273 = vmatpush1.msra.mxu0 %v261
    %274 = vmatprep.subr.mxu0 0.0
    %275 = vmatpush1.msra.mxu0 %v260
    %276 = vmatprep.subr.mxu0 0.0
    %277 = vmatpush1.msra.mxu0 %v259
    %278 = vmatprep.subr.mxu0 0.0
    %279 = vmatpush1.msra.mxu0 %v258
    %280 = vmatprep.subr.mxu0 0.0
    %281 = vmatpush1.msra.mxu0 %v257
    %282 = vmatprep.subr.mxu0 0.0
    %283 = vmatpush1.msra.mxu0 %v256
    %284 = vmatprep.subr.mxu0 0.0
    %285 = vmatpush1.msra.mxu0 %v255
    %286 = vmatprep.subr.mxu0 0.0
    %287 = vmatpush1.msra.mxu0 %v254
    %288 = vmatprep.subr.mxu0 0.0
    %289 = vmatpush1.msra.mxu0 %v253
    %290 = vmatprep.subr.mxu0 0.0
    %291 = vmatpush1.msra.mxu0 %v252
    %292 = vmatprep.subr.mxu0 0.0
    %293 = vmatpush1.msra.mxu0 %v251
    %294 = vmatprep.subr.mxu0 0.0
    %295 = vmatpush1.msra.mxu0 %v250
    %296 = vmatprep.subr.mxu0 0.0
    %297 = vmatpush1.msra.mxu0 %v249
    %298 = vmatprep.subr.mxu0 0.0
    %299 = vmatpush1.msra.mxu0 %v248
    %300 = vmatprep.subr.mxu0 0.0
    %301 = vmatpush1.msra.mxu0 %v247
    %302 = vmatprep.subr.mxu0 0.0
    %303 = vmatpush2.msra.mxu0 0.0
    %304 = vmatprep.subr.mxu0 0.0
    %305 = vmatpush2.msra.mxu0 0.0
    %306 = vmatprep.subr.mxu0 0.0
    %307 = vmatpush2.msra.mxu0 0.0
    %308 = vmatprep.subr.mxu0 0.0
    %309 = vmatpush2.msra.mxu0 0.0
    %310 = vmatprep.subr.mxu0 0.0
    %311 = vmatpush2.msra.mxu0 0.0
    %312 = vmatprep.subr.mxu0 0.0
    %313 = vmatpush2.msra.mxu0 0.0
    %314 = vmatprep.subr.mxu0 0.0
    %315 = vmatpush2.msra.mxu0 0.0
    %316 = vmatprep.subr.mxu0 0.0
    %317 = vmatpush2.msra.mxu0 0.0
    %318 = vmatprep.subr.mxu0 0.0
    %319 = vmatpush2.msra.mxu0 0.0
    %320 = vmatprep.subr.mxu0 0.0
    %321 = vmatpush2.msra.mxu0 0.0
    %322 = vmatprep.subr.mxu0 0.0
    %323 = vmatpush2.msra.mxu0 0.0
    %324 = vmatprep.subr.mxu0 0.0
    %325 = vmatpush2.msra.mxu0 0.0
    %326 = vmatprep.subr.mxu0 0.0
    %327 = vmatpush2.msra.mxu0 0.0
    %328 = vmatprep.subr.mxu0 0.0
    %329 = vmatpush2.msra.mxu0 0.0
    %330 = vmatprep.subr.mxu0 0.0
    %331 = vmatpush2.msra.mxu0 0.0
    %332 = vmatprep.subr.mxu0 0.0
    %333 = vmatpush2.msra.mxu0 0.0
    %334 = vmatprep.mubr.f32.mxu0 0.0
    %335 = vmatmul.mubr.f32.gmra.mxu0 %v245
    %v336 = vpop.f32.mrf.mxu0
    %v337 = vadd.f32 %v268, %v336
    %v338 = vpop.f32.mrf.mxu0
    %339 = vmatprep.mubr.f32.mxu0 0.0
    %340 = vmatmul.mubr.f32.gmra.mxu0 %v246
    %v341 = vpop.f32.mrf.mxu0
    %v342 = vadd.f32 %v268, %v341
    %v343 = vpop.f32.mrf.mxu0
    %344 = vdwg.mxu0
    %v345 = vmax.f32 %v337, 0.0
    %v346 = vmax.f32 %v342, 0.0
    %v347 = vld [vmem:[#allocation4] sm:$0xff]
    %v348 = vld [vmem:[#allocation4 + $0x8] sm:$0xff]
    %v349 = vld [vmem:[#allocation4 + $0x10] sm:$0xff]
    %v350 = vld [vmem:[#allocation4 + $0x18] sm:$0xff]
    %v351 = vld [vmem:[#allocation4 + $0x20] sm:$0xff]
    %v352 = vld [vmem:[#allocation4 + $0x28] sm:$0xff]
    %v353 = vld [vmem:[#allocation4 + $0x30] sm:$0xff]
    %v354 = vld [vmem:[#allocation4 + $0x38] sm:$0xff]
    %v355 = vld [vmem:[#allocation4 + $0x40] sm:$0xff]
    %v356 = vld [vmem:[#allocation4 + $0x48] sm:$0xff]
    %v357 = vld [vmem:[#allocation4 + $0x50] sm:$0xff]
    %v358 = vld [vmem:[#allocation4 + $0x58] sm:$0xff]
    %v359 = vld [vmem:[#allocation4 + $0x60] sm:$0xff]
    %v360 = vld [vmem:[#allocation4 + $0x68] sm:$0xff]
    %v361 = vld [vmem:[#allocation4 + $0x70] sm:$0xff]
    %v362 = vld [vmem:[#allocation4 + $0x78] sm:$0xff]
    %v363 = vld [vmem:[%s8] sm:$0x1]
    %v365 = vlaneseq
    %v366 = vshrl.u32 %v365, 7
    %v367 = vsub.s32 0, %v366
    %v368 = vrot.slane %v363, %v367
    %370 = vmatprep.subr.mxu0 0.0
    %371 = vmatpush1.msra.mxu0 %v362
    %372 = vmatprep.subr.mxu0 0.0
    %373 = vmatpush1.msra.mxu0 %v361
    %374 = vmatprep.subr.mxu0 0.0
    %375 = vmatpush1.msra.mxu0 %v360
    %376 = vmatprep.subr.mxu0 0.0
    %377 = vmatpush1.msra.mxu0 %v359
    %378 = vmatprep.subr.mxu0 0.0
    %379 = vmatpush1.msra.mxu0 %v358
    %380 = vmatprep.subr.mxu0 0.0
    %381 = vmatpush1.msra.mxu0 %v357
    %382 = vmatprep.subr.mxu0 0.0
    %383 = vmatpush1.msra.mxu0 %v356
    %384 = vmatprep.subr.mxu0 0.0
    %385 = vmatpush1.msra.mxu0 %v355
    %386 = vmatprep.subr.mxu0 0.0
    %387 = vmatpush1.msra.mxu0 %v354
    %388 = vmatprep.subr.mxu0 0.0
    %389 = vmatpush1.msra.mxu0 %v353
    %390 = vmatprep.subr.mxu0 0.0
    %391 = vmatpush1.msra.mxu0 %v352
    %392 = vmatprep.subr.mxu0 0.0
    %393 = vmatpush1.msra.mxu0 %v351
    %394 = vmatprep.subr.mxu0 0.0
    %395 = vmatpush1.msra.mxu0 %v350
    %396 = vmatprep.subr.mxu0 0.0
    %397 = vmatpush1.msra.mxu0 %v349
    %398 = vmatprep.subr.mxu0 0.0
    %399 = vmatpush1.msra.mxu0 %v348
    %400 = vmatprep.subr.mxu0 0.0
    %401 = vmatpush1.msra.mxu0 %v347
    %402 = vmatprep.subr.mxu0 0.0
    %403 = vmatpush2.msra.mxu0 0.0
    %404 = vmatprep.subr.mxu0 0.0
    %405 = vmatpush2.msra.mxu0 0.0
    %406 = vmatprep.subr.mxu0 0.0
    %407 = vmatpush2.msra.mxu0 0.0
    %408 = vmatprep.subr.mxu0 0.0
    %409 = vmatpush2.msra.mxu0 0.0
    %410 = vmatprep.subr.mxu0 0.0
    %411 = vmatpush2.msra.mxu0 0.0
    %412 = vmatprep.subr.mxu0 0.0
    %413 = vmatpush2.msra.mxu0 0.0
    %414 = vmatprep.subr.mxu0 0.0
    %415 = vmatpush2.msra.mxu0 0.0
    %416 = vmatprep.subr.mxu0 0.0
    %417 = vmatpush2.msra.mxu0 0.0
    %418 = vmatprep.subr.mxu0 0.0
    %419 = vmatpush2.msra.mxu0 0.0
    %420 = vmatprep.subr.mxu0 0.0
    %421 = vmatpush2.msra.mxu0 0.0
    %422 = vmatprep.subr.mxu0 0.0
    %423 = vmatpush2.msra.mxu0 0.0
    %424 = vmatprep.subr.mxu0 0.0
    %425 = vmatpush2.msra.mxu0 0.0
    %426 = vmatprep.subr.mxu0 0.0
    %427 = vmatpush2.msra.mxu0 0.0
    %428 = vmatprep.subr.mxu0 0.0
    %429 = vmatpush2.msra.mxu0 0.0
    %430 = vmatprep.subr.mxu0 0.0
    %431 = vmatpush2.msra.mxu0 0.0
    %432 = vmatprep.subr.mxu0 0.0
    %433 = vmatpush2.msra.mxu0 0.0
    %434 = vmatprep.mubr.f32.mxu0 0.0
    %435 = vmatmul.mubr.f32.gmra.mxu0 %v345
    %v436 = vpop.f32.mrf.mxu0
    %v437 = vadd.f32 %v368, %v436
    %v438 = vpop.f32.mrf.mxu0
    %439 = vmatprep.mubr.f32.mxu0 0.0
    %440 = vmatmul.mubr.f32.gmra.mxu0 %v346
    %v441 = vpop.f32.mrf.mxu0
    %v442 = vadd.f32 %v368, %v441
    %v443 = vpop.f32.mrf.mxu0
    %444 = vdwg.mxu0
    %445 = vst [vmem:[%s9] sm:$0xff] %v437
    %446 = vst [vmem:[%s9 + $0x8] sm:$0xff] %v442
    // Predicated region
    $region46: #{_forward_impl.1} parent=1 // pred_check
      _
    $region47: #{_forward_impl.1} parent=1 // pred_check_branch
      %448 = sbr.rel (0) target = $region49
    $region48: #{_forward_impl.1} parent=1 // pred_region
      _
    $region49: #{_forward_impl.1} parent=1 // pred_fallthru
      _
    // Predicated region
    $region50: #{_forward_impl.1} parent=1 // pred_check
      _
    $region51: #{_forward_impl.1} parent=1 // pred_check_branch
      %450 = sbr.rel (0) target = $region53
    $region52: #{_forward_impl.1} parent=1 // pred_region
      _
    $region53: #{_forward_impl.1} parent=1 // pred_fallthru
      _
    %451 = vsyncpa [#allocation3], 1
    %452 = vsyncpa [#allocation5], 1

</llo_original>
